<compile_context>
chip_gen: v7x
topology: tpu7x:2x2x1
jax: 0.10.0
libtpu: 0.0.40
codegen_flags: <defaults>
</compile_context>

<pallas_src>
import functools

import jax
import jax.numpy as jnp
from jax.experimental import pallas as pl
from jax.experimental.pallas import tpu as pltpu

# Large-negative *finite* sentinel used for padding / init (avoids -inf NaNs
# in the online-softmax rescale; representable in bf16 and f32).
_NEG = -1e30


def _round_up(x, m):
    return (x + m - 1) // m * m


def _nce_kernel(x_ref, o_ref, m_scr, l_scr, tgt_scr, *, n_rows, lane_chunks):
    """Streaming logsumexp over the class axis; positive class is column 0.

    x_ref:   (TB, TK)     logits tile, native dtype (upcast in-kernel)
    o_ref:   (1, 8, 128)  per-batch-tile partial loss sum (lane-dense store)
    m_scr:   (TB, 128)    lane-wise running max        (f32 scratch)
    l_scr:   (TB, 128)    lane-wise running exp-sum    (f32 scratch)
    tgt_scr: (TB, 1)      positive-class logit x[:, 0] (f32 scratch)
    """
    bi = pl.program_id(0)
    kj = pl.program_id(1)
    nk = pl.num_programs(1)
    tb = m_scr.shape[0]

    @pl.when(kj == 0)
    def _init():
        m_scr[...] = jnp.full_like(m_scr, _NEG)
        l_scr[...] = jnp.zeros_like(l_scr)
        # Positive-class logit lives in global column 0 -> first K tile, col 0.
        tgt_scr[...] = x_ref[:, 0:1].astype(jnp.float32)

    # ---- lane-wise online logsumexp update for this K tile -----------------
    # Pass 1 (VALU only): fold this tile into the lane-wise running max.
    m_old = m_scr[...]
    m_new = m_old
    for c in range(lane_chunks):
        chunk = x_ref[:, c * 128:(c + 1) * 128].astype(jnp.float32)
        m_new = jnp.maximum(m_new, chunk)
    # One rescale of the running sum per tile (one EUP exp per lane per tile).
    l = l_scr[...] * jnp.exp(m_old - m_new)
    # Pass 2: accumulate exp(x - m_new) lane-wise (one EUP exp per element,
    # plain VALU adds; no cross-lane XLU work in the hot loop).
    for c in range(lane_chunks):
        chunk = x_ref[:, c * 128:(c + 1) * 128].astype(jnp.float32)
        l = l + jnp.exp(chunk - m_new)
    m_scr[...] = m_new
    l_scr[...] = l

    # ---- finalize: single cross-lane reduce per batch tile ------------------
    @pl.when(kj == nk - 1)
    def _finalize():
        m = m_scr[...]                                                   # (TB,128)
        lsum = l_scr[...]
        row_max = jnp.max(m, axis=-1, keepdims=True)                     # (TB,1)
        row_sum = jnp.sum(lsum * jnp.exp(m - row_max), axis=-1, keepdims=True)
        lse = row_max + jnp.log(row_sum)                                 # (TB,1)
        per_row = lse - tgt_scr[...]                                     # (TB,1)
        # Zero out rows that are pure batch padding.
        rows = jax.lax.broadcasted_iota(jnp.int32, (tb, 1), 0) + bi * tb
        per_row = jnp.where(rows < n_rows, per_row, 0.0)
        partial = jnp.sum(per_row)                                       # scalar
        # Lane-dense (unmasked) store of this tile's partial sum.
        o_ref[...] = jnp.broadcast_to(partial, o_ref.shape)


def nce_softmax_loss(x, *, block_rows=512, block_k=2048):
    """info-NCE loss: mean_i [ logsumexp(x_i) - x_i[:, 0] ]  (target class 0).

    x: (bsz, K, 1) or (bsz, K) logits, any float dtype (bf16 recommended; the
    kernel upcasts per tile, so no wrapper-side f32 HBM copy). Returns f32 scalar.
    """
    if x.ndim == 3 and x.shape[-1] == 1:
        logits = x[..., 0]          # torch's .squeeze() on (bsz, K, 1)
    elif x.ndim == 2:
        logits = x
    else:
        raise ValueError(f"expected (bsz, K[, 1]) logits, got shape {x.shape}")

    B, K = logits.shape
    TB = min(block_rows, _round_up(B, 16))   # 16: bf16 sublane packing
    TK = min(block_k, _round_up(K, 128))     # lane (class) axis multiple of 128
    Bp = _round_up(B, TB)
    Kp = _round_up(K, TK)
    if (Bp, Kp) != (B, K):
        # Pad with a large-negative finite sentinel: padded columns vanish from
        # the logsumexp; padded rows are masked out inside the kernel.
        logits = jnp.pad(logits, ((0, Bp - B), (0, Kp - K)),
                         constant_values=_NEG)

    n_btiles = Bp // TB
    n_ktiles = Kp // TK
    kernel = functools.partial(_nce_kernel, n_rows=B, lane_chunks=TK // 128)

    partials = pl.pallas_call(
        kernel,
        out_shape=jax.ShapeDtypeStruct((n_btiles, 8, 128), jnp.float32),
        grid_spec=pltpu.PrefetchScalarGridSpec(
            num_scalar_prefetch=0,
            grid=(n_btiles, n_ktiles),
            in_specs=[pl.BlockSpec((TB, TK), lambda bi, kj: (bi, kj))],
            out_specs=pl.BlockSpec((1, 8, 128), lambda bi, kj: (bi, 0, 0)),
            scratch_shapes=[
                pltpu.VMEM((TB, 128), jnp.float32),   # lane-wise running max
                pltpu.VMEM((TB, 128), jnp.float32),   # lane-wise running exp-sum
                pltpu.VMEM((TB, 1), jnp.float32),     # positive-class logit
            ],
        ),
        compiler_params=pltpu.CompilerParams(
            dimension_semantics=("parallel", "arbitrary"),
        ),
        cost_estimate=pl.CostEstimate(
            flops=3 * Bp * Kp,
            transcendentals=Bp * Kp,
            bytes_accessed=Bp * Kp * logits.dtype.itemsize + n_btiles * 8 * 128 * 4,
        ),
    )(logits)

    # Per-tile partial sums -> mean over the true batch (finished in plain JAX).
    return jnp.sum(partials[:, 0, 0]) / jnp.float32(B)


if __name__ == "__main__":
    key = jax.random.PRNGKey(0)
    k1, k2 = jax.random.split(key)

    # Case 1: f32 logits with shapes that exercise row AND column padding.
    bsz, K = 6, 200
    x = jax.random.normal(k1, (bsz, K, 1), dtype=jnp.float32)
    loss = jax.block_until_ready(nce_softmax_loss(x))
    x2d = x[..., 0]
    ref = jnp.mean(jax.nn.logsumexp(x2d, axis=-1) - x2d[:, 0])
    assert jnp.allclose(loss, ref, atol=1e-5, rtol=1e-5), (loss, ref)

    # Case 2: bf16 logits (recommended producer dtype) — upcast happens in-kernel.
    bsz2, K2 = 8, 384
    xb = jax.random.normal(k2, (bsz2, K2, 1), dtype=jnp.float32).astype(jnp.bfloat16)
    loss_b = jax.block_until_ready(nce_softmax_loss(xb))
    xb2d = xb[..., 0].astype(jnp.float32)
    ref_b = jnp.mean(jax.nn.logsumexp(xb2d, axis=-1) - xb2d[:, 0])
    assert jnp.allclose(loss_b, ref_b, atol=1e-4, rtol=1e-4), (loss_b, ref_b)

    print("KERNEL_OK")
</pallas_src>

<mosaic_0001>
module attributes {stable_mosaic.version = 11 : i64} {
  func.func @_nce_kernel(%arg0: i32, %arg1: i32, %arg2: memref<16x256xf32, #tpu.memory_space<vmem>>, %arg3: memref<1x8x128xf32, #tpu.memory_space<vmem>>, %arg4: memref<16x128xf32, #tpu.memory_space<vmem>>, %arg5: memref<16x128xf32, #tpu.memory_space<vmem>>, %arg6: memref<16x1xf32, #tpu.memory_space<vmem>>) attributes {dimension_semantics = [#tpu.dimension_semantics<parallel>, #tpu.dimension_semantics<arbitrary>], iteration_bounds = array<i64: 1, 1>, scalar_prefetch = 0 : i64, scratch_operands = 3 : i64, tpu.core_type = #tpu.core_type<tc>, window_params = [{transform_indices = @transform_0, window_bounds = array<i64: 16, 256>}, {transform_indices = @transform_1, window_bounds = array<i64: 1, 8, 128>}]} {
    %c0_i32 = arith.constant 0 : i32
    %0 = arith.cmpi eq, %arg1, %c0_i32 : i32
    %1 = arith.extui %0 : i1 to i32
    %c0_i32_0 = arith.constant 0 : i32
    %2 = arith.cmpi ne, %1, %c0_i32_0 : i32
    scf.if %2 {
      %cst = arith.constant -1.000000e+30 : f32
      %25 = vector.broadcast %cst : f32 to vector<16x128xf32>
      %c0_17 = arith.constant 0 : index
      %c0_18 = arith.constant 0 : index
      %26 = vector.load %arg4[%c0_17, %c0_18] : memref<16x128xf32, #tpu.memory_space<vmem>>, vector<16x128xf32>
      tpu.vector_store %arg4[%c0_17, %c0_18], %25 {strides = array<i32>} : memref<16x128xf32, #tpu.memory_space<vmem>>, vector<16x128xf32>,
      %cst_19 = arith.constant 0.000000e+00 : f32
      %27 = vector.broadcast %cst_19 : f32 to vector<16x128xf32>
      %c0_20 = arith.constant 0 : index
      %c0_21 = arith.constant 0 : index
      %28 = vector.load %arg5[%c0_20, %c0_21] : memref<16x128xf32, #tpu.memory_space<vmem>>, vector<16x128xf32>
      tpu.vector_store %arg5[%c0_20, %c0_21], %27 {strides = array<i32>} : memref<16x128xf32, #tpu.memory_space<vmem>>, vector<16x128xf32>,
      %c0_22 = arith.constant 0 : index
      %c0_23 = arith.constant 0 : index
      %29 = vector.load %arg2[%c0_22, %c0_23] : memref<16x256xf32, #tpu.memory_space<vmem>>, vector<16x1xf32>
      %c0_24 = arith.constant 0 : index
      %c0_25 = arith.constant 0 : index
      %30 = vector.load %arg6[%c0_24, %c0_25] : memref<16x1xf32, #tpu.memory_space<vmem>>, vector<16x1xf32>
      tpu.vector_store %arg6[%c0_24, %c0_25], %29 {strides = array<i32>} : memref<16x1xf32, #tpu.memory_space<vmem>>, vector<16x1xf32>,
    } else {
    }
    %c0 = arith.constant 0 : index
    %c0_1 = arith.constant 0 : index
    %3 = vector.load %arg4[%c0, %c0_1] : memref<16x128xf32, #tpu.memory_space<vmem>>, vector<16x128xf32>
    %c0_2 = arith.constant 0 : index
    %c0_3 = arith.constant 0 : index
    %4 = vector.load %arg2[%c0_2, %c0_3] : memref<16x256xf32, #tpu.memory_space<vmem>>, vector<16x128xf32>
    %5 = arith.maximumf %3, %4 : vector<16x128xf32>
    %c0_4 = arith.constant 0 : index
    %c128 = arith.constant 128 : index
    %6 = vector.load %arg2[%c0_4, %c128] : memref<16x256xf32, #tpu.memory_space<vmem>>, vector<16x128xf32>
    %7 = arith.maximumf %5, %6 : vector<16x128xf32>
    %c0_5 = arith.constant 0 : index
    %c0_6 = arith.constant 0 : index
    %8 = vector.load %arg5[%c0_5, %c0_6] : memref<16x128xf32, #tpu.memory_space<vmem>>, vector<16x128xf32>
    %9 = arith.subf %3, %7 : vector<16x128xf32>
    %10 = math.exp %9 : vector<16x128xf32>
    %11 = arith.mulf %8, %10 : vector<16x128xf32>
    %c0_7 = arith.constant 0 : index
    %c0_8 = arith.constant 0 : index
    %12 = vector.load %arg2[%c0_7, %c0_8] : memref<16x256xf32, #tpu.memory_space<vmem>>, vector<16x128xf32>
    %13 = arith.subf %12, %7 : vector<16x128xf32>
    %14 = math.exp %13 : vector<16x128xf32>
    %15 = arith.addf %11, %14 : vector<16x128xf32>
    %c0_9 = arith.constant 0 : index
    %c128_10 = arith.constant 128 : index
    %16 = vector.load %arg2[%c0_9, %c128_10] : memref<16x256xf32, #tpu.memory_space<vmem>>, vector<16x128xf32>
    %17 = arith.subf %16, %7 : vector<16x128xf32>
    %18 = math.exp %17 : vector<16x128xf32>
    %19 = arith.addf %15, %18 : vector<16x128xf32>
    %c0_11 = arith.constant 0 : index
    %c0_12 = arith.constant 0 : index
    %20 = vector.load %arg4[%c0_11, %c0_12] : memref<16x128xf32, #tpu.memory_space<vmem>>, vector<16x128xf32>
    tpu.vector_store %arg4[%c0_11, %c0_12], %7 {strides = array<i32>} : memref<16x128xf32, #tpu.memory_space<vmem>>, vector<16x128xf32>,
    %c0_13 = arith.constant 0 : index
    %c0_14 = arith.constant 0 : index
    %21 = vector.load %arg5[%c0_13, %c0_14] : memref<16x128xf32, #tpu.memory_space<vmem>>, vector<16x128xf32>
    tpu.vector_store %arg5[%c0_13, %c0_14], %19 {strides = array<i32>} : memref<16x128xf32, #tpu.memory_space<vmem>>, vector<16x128xf32>,
    %c0_i32_15 = arith.constant 0 : i32
    %22 = arith.cmpi eq, %arg1, %c0_i32_15 : i32
    %23 = arith.extui %22 : i1 to i32
    %c0_i32_16 = arith.constant 0 : i32
    %24 = arith.cmpi ne, %23, %c0_i32_16 : i32
    scf.if %24 {
      %c0_17 = arith.constant 0 : index
      %c0_18 = arith.constant 0 : index
      %25 = vector.load %arg4[%c0_17, %c0_18] : memref<16x128xf32, #tpu.memory_space<vmem>>, vector<16x128xf32>
      %c0_19 = arith.constant 0 : index
      %c0_20 = arith.constant 0 : index
      %26 = vector.load %arg5[%c0_19, %c0_20] : memref<16x128xf32, #tpu.memory_space<vmem>>, vector<16x128xf32>
      %cst = arith.constant dense<0xFF800000> : vector<16xf32>
      %27 = vector.multi_reduction <maximumf>, %25, %cst [1] : vector<16x128xf32> to vector<16xf32>
      %28 = vector.shape_cast %27 : vector<16xf32> to vector<16x1xf32>
      %29 = vector.broadcast %28 : vector<16x1xf32> to vector<16x128xf32>
      %30 = arith.subf %25, %29 : vector<16x128xf32>
      %31 = math.exp %30 : vector<16x128xf32>
      %32 = arith.mulf %26, %31 : vector<16x128xf32>
      %cst_21 = arith.constant dense<0.000000e+00> : vector<16xf32>
      %33 = vector.multi_reduction <add>, %32, %cst_21 [1] : vector<16x128xf32> to vector<16xf32>
      %34 = vector.shape_cast %33 : vector<16xf32> to vector<16x1xf32>
      %35 = math.log %34 : vector<16x1xf32>
      %36 = arith.addf %28, %35 : vector<16x1xf32>
      %c0_22 = arith.constant 0 : index
      %c0_23 = arith.constant 0 : index
      %37 = vector.load %arg6[%c0_22, %c0_23] : memref<16x1xf32, #tpu.memory_space<vmem>>, vector<16x1xf32>
      %38 = arith.subf %36, %37 : vector<16x1xf32>
      %39 = tpu.iota {dimensions = array<i32: 0>} : vector<16x1xi32>
      %c16_i32 = arith.constant 16 : i32
      %40 = arith.muli %arg0, %c16_i32 : i32
      %41 = vector.broadcast %40 : i32 to vector<16x1xi32>
      %42 = arith.addi %39, %41 : vector<16x1xi32>
      %c6_i32 = arith.constant 6 : i32
      %43 = vector.broadcast %c6_i32 : i32 to vector<16x1xi32>
      %44 = arith.cmpi slt, %42, %43 : vector<16x1xi32>
      %cst_24 = arith.constant 0.000000e+00 : f32
      %45 = vector.broadcast %cst_24 : f32 to vector<16x1xf32>
      %46 = arith.select %44, %38, %45 : vector<16x1xi1>, vector<16x1xf32>
      %47 = vector.shape_cast %46 : vector<16x1xf32> to vector<1x16x1xf32>
      %cst_25 = arith.constant dense<0.000000e+00> : vector<1xf32>
      %48 = vector.multi_reduction <add>, %47, %cst_25 [1, 2] : vector<1x16x1xf32> to vector<1xf32>
      %49 = vector.shape_cast %48 : vector<1xf32> to vector<1x1x1xf32>
      %50 = vector.extract %49[0, 0, 0] : f32 from vector<1x1x1xf32>
      %51 = vector.broadcast %50 : f32 to vector<1x8x128xf32>
      %c0_26 = arith.constant 0 : index
      %c0_27 = arith.constant 0 : index
      %c0_28 = arith.constant 0 : index
      %52 = vector.load %arg3[%c0_26, %c0_27, %c0_28] : memref<1x8x128xf32, #tpu.memory_space<vmem>>, vector<1x8x128xf32>
      tpu.vector_store %arg3[%c0_26, %c0_27, %c0_28], %51 {strides = array<i32>} : memref<1x8x128xf32, #tpu.memory_space<vmem>>, vector<1x8x128xf32>,
    } else {
    }
    return
  }
  func.func @transform_0(%arg0: i32, %arg1: i32) -> (i32, i32) {
    %c0_i32 = arith.constant 0 : i32
    return %arg0, %arg1 : i32, i32
  }
  func.func @transform_1(%arg0: i32, %arg1: i32) -> (i32, i32, i32) {
    %c0_i32 = arith.constant 0 : i32
    %c0_i32_0 = arith.constant 0 : i32
    %c0_i32_1 = arith.constant 0 : i32
    return %arg0, %c0_i32, %c0_i32_0 : i32, i32, i32
  }
}

</mosaic_0001>

<llo_original>
// kernel: tpu_custom_call.1
$region0: #{tpu_custom_call.1}
  #allocation0 [shape = 'u32[]', space=smem, size = 0x4, offset = 0x4, fixed_abs, tag = 'smem constant byte address 0x4 - core index']
  #allocation1 [shape = 'u32[144,128]{1,0:T(1,128)}', space=vmem, size = 0x12000, scoped, tag = 'internal scratch']
  #allocation2 [shape = 'f32[16,128]{1,0:T(8,128)}', space=vmem, size = 0x2000, scoped, tag = 'scratch operand']
  #allocation3 [shape = 'f32[16,128]{1,0:T(8,128)}', space=vmem, size = 0x2000, scoped, tag = 'scratch operand']
  #allocation4 [shape = 'f32[16,1]{1,0:T(8,128)}', space=vmem, size = 0x2000, scoped, tag = 'scratch operand']
  %s0 = inlined_call_operand.hbm [shape: f32[16,256], index: 0, kind: input, shape index: {}]
  %s1 = inlined_call_operand.hbm [shape: f32[1,8,128], index: 1, kind: output, shape index: {}]
  %s2 = sld [smem:[#allocation0]]
  $region26: #{tpu_custom_call.1} parent=0
    _
  %s4 = ssub.s32 1, %s2
  %s5 = scalar_select 0, %s4, %s2
  $region1: #{tpu_custom_call.1} parent=0
    #allocation5 [shape = 'u8[16384]{0}', space=vmem, size = 0x4000, scoped, tag = 'input window, operand 0, single buffered']
    #allocation6 [shape = 's32[1]{0}', space=sflag, size = 0x4, scoped, tag = 'scoped memory for tpu_custom_call.1']
    #allocation7 [shape = 's32[1]{0}', space=sflag, size = 0x4, scoped, tag = 'scoped memory for tpu_custom_call.1']
    #allocation8 [shape = 'u8[4096]{0}', space=vmem, size = 0x1000, scoped, tag = 'output window, operand 0, single buffered']
    %6 = vsyncpa [#allocation6], 0
    %7 = vsyncpa [#allocation7], 0
    // Predicated region
    $region2: #{tpu_custom_call.1} parent=1 // pred_check
      _
    $region3: #{tpu_custom_call.1} parent=1 // pred_check_branch
      %9 = sbr.rel (0) target = $region5
    $region4: #{tpu_custom_call.1} parent=1 // pred_region
      %s11 = ssub.s32 512, 512
      %12 = vsyncadd [#allocation6], %s11
      %s13 = sshll.u32 [#allocation5], 4
      %s14 = int_to_ptr.vmem [resolvable:$true] %s13
      %19 = dma.hbm_to_vmem [thread:$0]  %s0, 512, %s14, [#allocation6], 256, 256, 16
    $region5: #{tpu_custom_call.1} parent=1 // pred_fallthru
      _
    // Predicated region
    $region6: #{tpu_custom_call.1} parent=1 // pred_check
      _
    $region7: #{tpu_custom_call.1} parent=1 // pred_check_branch
      %21 = sbr.rel (0) target = $region9
    $region8: #{tpu_custom_call.1} parent=1 // pred_region
      %22 = dma.done [#allocation6], 512
    $region9: #{tpu_custom_call.1} parent=1 // pred_fallthru
      _
    %p23 = scmp.eq.s32.totalorder 0, 0
    // Predicated region
    $region10: #{tpu_custom_call.1} parent=1 // pred_check
      %p24 = pneg %p23
    $region11: #{tpu_custom_call.1} parent=1 // pred_check_branch
      %26 = sbr.rel (%p24) target = $region13
    $region12: #{tpu_custom_call.1} parent=1 // pred_region
      %27 = vst [vmem:[#allocation2] sm:$0xff] -1e+30
      %28 = vst [vmem:[#allocation2 + $0x8] sm:$0xff] -1e+30
      %29 = vst [vmem:[#allocation3] sm:$0xff] 0.0
      %30 = vst [vmem:[#allocation3 + $0x8] sm:$0xff] 0.0
      %v31 = vld [vmem:[#allocation5] sm:$0xff]
      %v32 = vld [vmem:[#allocation5 + $0x10] sm:$0xff]
      %vm33 = vcmask 7168
      %34 = vst.msk [vmem:[#allocation4] sm:$0xff] %vm33, %v31
      %35 = vst.msk [vmem:[#allocation4 + $0x8] sm:$0xff] %vm33, %v32
    $region13: #{tpu_custom_call.1} parent=1 // pred_fallthru
      _
    %v36 = vld [vmem:[#allocation2] sm:$0xff]
    %v37 = vld [vmem:[#allocation2 + $0x8] sm:$0xff]
    %v38 = vld [vmem:[#allocation5] sm:$0xff]
    %v39 = vld [vmem:[#allocation5 + $0x10] sm:$0xff]
    %v40 = vmax.f32 %v36, %v38
    %v41 = vmax.f32 %v37, %v39
    %v42 = vld [vmem:[#allocation5 + $0x8] sm:$0xff]
    %v43 = vld [vmem:[#allocation5 + $0x18] sm:$0xff]
    %v44 = vmax.f32 %v40, %v42
    %v45 = vmax.f32 %v41, %v43
    %v46 = vld [vmem:[#allocation3] sm:$0xff]
    %v47 = vld [vmem:[#allocation3 + $0x8] sm:$0xff]
    %v48 = vsub.f32 %v36, %v44
    %v49 = vsub.f32 %v37, %v45
    %v50 = vmul.f32 %v48, 1.442695
    %v51 = vpow.pop %v50
    %v52 = vmul.f32 %v49, 1.442695
    %v53 = vpow.pop %v52
    %v54 = vmul.f32 %v46, %v51
    %v55 = vmul.f32 %v47, %v53
    %v56 = vsub.f32 %v38, %v44
    %v57 = vsub.f32 %v39, %v45
    %v58 = vmul.f32 %v56, 1.442695
    %v59 = vpow.pop %v58
    %v60 = vmul.f32 %v57, 1.442695
    %v61 = vpow.pop %v60
    %v62 = vadd.f32 %v54, %v59
    %v63 = vadd.f32 %v55, %v61
    %v64 = vsub.f32 %v42, %v44
    %v65 = vsub.f32 %v43, %v45
    %v66 = vmul.f32 %v64, 1.442695
    %v67 = vpow.pop %v66
    %v68 = vmul.f32 %v65, 1.442695
    %v69 = vpow.pop %v68
    %v70 = vadd.f32 %v62, %v67
    %v71 = vadd.f32 %v63, %v69
    %72 = vst [vmem:[#allocation2] sm:$0xff] %v44
    %73 = vst [vmem:[#allocation2 + $0x8] sm:$0xff] %v45
    %74 = vst [vmem:[#allocation3] sm:$0xff] %v70
    %75 = vst [vmem:[#allocation3 + $0x8] sm:$0xff] %v71
    // Predicated region
    $region14: #{tpu_custom_call.1} parent=1 // pred_check
      %p76 = pneg %p23
    $region15: #{tpu_custom_call.1} parent=1 // pred_check_branch
      %78 = sbr.rel (%p76) target = $region17
    $region16: #{tpu_custom_call.1} parent=1 // pred_region
      %v79 = vld [vmem:[#allocation2] sm:$0xff]
      %v80 = vld [vmem:[#allocation2 + $0x8] sm:$0xff]
      %v81 = vld [vmem:[#allocation3] sm:$0xff]
      %v82 = vld [vmem:[#allocation3 + $0x8] sm:$0xff]
      %83 = vmax.xlane.f32.xlu0 %v79
      %v84 = vpop.xlane.xlu0 %83
      %85 = vmax.xlane.f32.xlu0 %v80
      %v86 = vpop.xlane.xlu0 %85
      %v87 = vsub.f32 %v79, %v84
      %v88 = vsub.f32 %v80, %v86
      %v89 = vmul.f32 %v87, 1.442695
      %v90 = vpow.pop %v89
      %v91 = vmul.f32 %v88, 1.442695
      %v92 = vpow.pop %v91
      %v93 = vmul.f32 %v81, %v90
      %v94 = vmul.f32 %v82, %v92
      %95 = vadd.xlane.f32.xlu0 %v93
      %v96 = vpop.xlane.xlu0 %95
      %97 = vadd.xlane.f32.xlu0 %v94
      %v98 = vpop.xlane.xlu0 %97
      %v99 = vlog2.pop %v96
      %v100 = vmul.f32 %v99, 0.6931472
      %v101 = vlog2.pop %v98
      %v102 = vmul.f32 %v101, 0.6931472
      %v103 = vadd.f32 %v84, %v100
      %v104 = vadd.f32 %v86, %v102
      %v105 = vld [vmem:[#allocation4] sm:$0xff]
      %v106 = vld [vmem:[#allocation4 + $0x8] sm:$0xff]
      %v107 = vsub.f32 %v103, %v105
      %v108 = vsub.f32 %v104, %v106
      %v109 = vlaneseq
      %v110 = vshrl.u32 %v109, 7
      %v111 = vadd.s32 %v110, 8
      %s112 = smul.u32 0, 16
      %v113 = vstv %s112
      %v114 = vadd.s32 %v110, %v113
      %v115 = vadd.s32 %v111, %v113
      %vm116 = vcmp.lt.s32.totalorder %v114, 6
      %vm117 = vcmp.lt.s32.totalorder %v115, 6
      %v118 = vsel %vm116, %v107, 0.0
      %v119 = vsel %vm117, %v108, 0.0
      %vm120 = vcmask 7168
      %v121 = vsel %vm120, %v118, 0.0
      %v122 = vsel %vm120, %v119, 0.0
      %v123 = vadd.f32 %v121, %v122
      %124 = vadd.xlane.f32.xlu0 %v123
      %v125 = vpop.xlane.xlu0 %124
      %v126 = vrot.slane %v125, 4
      %v127 = vadd.f32 %v125, %v126
      %v128 = vrot.slane %v127, 2
      %v129 = vadd.f32 %v127, %v128
      %v130 = vrot.slane %v129, 1
      %v131 = vadd.f32 %v129, %v130
      %s132 = vtos %v131
      %v133 = vstv %s132
      %134 = vst [vmem:[#allocation8] sm:$0xff] %v133
    $region17: #{tpu_custom_call.1} parent=1 // pred_fallthru
      _
    // Predicated region
    $region18: #{tpu_custom_call.1} parent=1 // pred_check
      _
    $region19: #{tpu_custom_call.1} parent=1 // pred_check_branch
      %136 = sbr.rel (0) target = $region21
    $region20: #{tpu_custom_call.1} parent=1 // pred_region
      %s138 = ssub.s32 128, 128
      %139 = vsyncadd [#allocation7], %s138
      %s141 = sshll.u32 [#allocation8], 4
      %s142 = int_to_ptr.vmem [resolvable:$true] %s141
      %144 = dma.vmem_to_hbm [thread:$0]  %s142, 128, %s1, [#allocation7]
    $region21: #{tpu_custom_call.1} parent=1 // pred_fallthru
      _
    // Predicated region
    $region22: #{tpu_custom_call.1} parent=1 // pred_check
      _
    $region23: #{tpu_custom_call.1} parent=1 // pred_check_branch
      %146 = sbr.rel (0) target = $region25
    $region24: #{tpu_custom_call.1} parent=1 // pred_region
      %147 = dma.done [#allocation7], 128
    $region25: #{tpu_custom_call.1} parent=1 // pred_fallthru
      _
    %148 = vsyncpa [#allocation6], 1
    %149 = vsyncpa [#allocation7], 1

</llo_original>
